<compile_context>
chip_gen: v5e
topology: v5e:2x2
jax: 0.10.0
libtpu: 0.0.40
codegen_flags: <defaults>
</compile_context>

<pallas_src>
import functools
import math

import jax
import jax.numpy as jnp
from jax import lax
from jax.experimental import pallas as pl
from jax.experimental.pallas import tpu as pltpu

EPS = 1e-08
SMOOTH = 0.01


def _sublane_align(itemsize: int) -> int:
    # native sublane tile: 8 rows (f32), 16 (bf16), 32 (int8)
    return 8 * max(1, 4 // int(itemsize))


def _vmem_per_core_bytes() -> int:
    cap = 0
    try:
        cap = int(pltpu.get_tpu_info().vmem_capacity_bytes)
    except Exception:
        cap = 0
    if cap <= 0:
        cap = 64 << 20
    kind = ""
    try:
        kind = jax.devices()[0].device_kind.lower()
    except Exception:
        pass
    # v7x has 2 TensorCores/chip and 64 MiB VMEM per core; clamp in case the
    # info object reports per-chip capacity.
    if "v7" in kind or "7x" in kind:
        cap = min(cap, 64 << 20)
    return cap


def _iou_partials_kernel(logit_ref, gt_ref, *out_refs,
                         chunk, full_chunks, last_chunks, num_tiles,
                         tiles_per_split, per_channel, from_labels,
                         uniform, need_tail_mask, n_valid_last_tile):
    """Accumulates per-(batch, split[, channel], sublane, lane) partial sums.

    out_refs: (tp, sum_gt) blocks (1, 8, 128)            -- default path
              (tp, sum_gt, sum_pred) blocks (1, C, 8, 128) -- ignore_label path
    """
    C = logit_ref.shape[1]
    p = pl.program_id(1)                 # spatial split (parallel)
    s = pl.program_id(2)                 # spatial tiles within split (reduction)
    t = p * tiles_per_split + s          # global spatial tile index

    @pl.when(s == 0)
    def _init():
        for r in out_refs:
            r[...] = jnp.zeros_like(r)

    def fold(a):                          # (..., chunk, 128) -> (..., 8, 128)
        if chunk == 8:
            return a
        return a.reshape(a.shape[:-2] + (chunk // 8, 8, 128)).sum(axis=-3)

    def chunk_parts(row, mask):
        # Channel softmax on one (C, chunk, 128) sublane group; C sits off the
        # tiled dims so the max/sum over C are plain per-vreg VPU ops.
        x = logit_ref[0, :, pl.ds(row, chunk), :].astype(jnp.float32)
        m = jnp.max(x, axis=0)
        e = jnp.exp(x - m[None])
        inv = pl.reciprocal(jnp.sum(e, axis=0), approx=True)   # EUP; loss-grade
        if from_labels:
            lab = gt_ref[0, pl.ds(row, chunk), :]               # (chunk, 128) int
            if per_channel:
                pred = e * inv[None]                            # (C, chunk, 128)
                g = jnp.stack([(lab == c).astype(jnp.float32) for c in range(C)],
                              axis=0)
                sp = pred if mask is None else pred * mask[None]
                return pred * g, g, sp
            num = jnp.zeros_like(inv)
            for c in range(C):
                num = num + jnp.where(lab == c, e[c], 0.0)
            sg = ((lab >= 0) & (lab < C)).astype(jnp.float32)
            return num * inv, sg
        g = gt_ref[0, :, pl.ds(row, chunk), :].astype(jnp.float32)
        if per_channel:
            pred = e * inv[None]
            sp = pred if mask is None else pred * mask[None]
            return pred * g, g, sp
        # Fold over C before the reciprocal: one multiply per position.
        return jnp.sum(e * g, axis=0) * inv, jnp.sum(g, axis=0)

    if per_channel:
        acc_shapes = ((C, 8, 128),) * 3
    else:
        acc_shapes = ((8, 128),) * 2

    def run(n_chunks, masked_tail):
        # n_chunks / masked_tail are trace-time constants.
        n_plain = n_chunks - (1 if masked_tail else 0)
        carry = tuple(jnp.zeros(shp, jnp.float32) for shp in acc_shapes)

        def step(i, cr):
            row = i * chunk
            if not isinstance(row, int):
                row = pl.multiple_of(row, chunk)
            parts = chunk_parts(row, None)
            return tuple(c + fold(pt) for c, pt in zip(cr, parts))

        if n_plain > 2:
            carry = lax.fori_loop(0, n_plain, step, carry, unroll=2)
        else:
            for i in range(n_plain):
                carry = step(i, carry)

        if masked_tail:
            # Only the final chunk of the final tile can contain padded
            # positions; only sum(pred) (ignore_label path) needs the mask.
            row0 = (n_chunks - 1) * chunk
            r_i = lax.broadcasted_iota(jnp.int32, (chunk, 128), 0)
            l_i = lax.broadcasted_iota(jnp.int32, (chunk, 128), 1)
            valid = ((row0 + r_i) * 128 + l_i) < n_valid_last_tile
            parts = chunk_parts(row0, valid.astype(jnp.float32))
            carry = tuple(c + fold(pt) for c, pt in zip(carry, parts))

        for r, c in zip(out_refs, carry):
            r[...] += c[None]

    if uniform:
        run(full_chunks, False)
    else:
        if num_tiles > 1:
            @pl.when(t < num_tiles - 1)
            def _full_tiles():
                run(full_chunks, False)

        @pl.when(t == num_tiles - 1)
        def _last_tile():
            run(last_chunks, need_tail_mask)
        # t >= num_tiles (phantom tiles from the split rounding): skipped.


def _iou_partial_sums(logit, gt, *, from_labels, per_channel, max_tile_rows=None):
    B, C = int(logit.shape[0]), int(logit.shape[1])
    spatial = tuple(int(d) for d in logit.shape[2:])
    N = int(math.prod(spatial)) if spatial else 1

    logit3 = logit.reshape(B, C, N)
    if from_labels:
        gt3 = gt if jnp.issubdtype(gt.dtype, jnp.integer) else gt.astype(jnp.int32)
        gt3 = gt3.reshape(B, N)
        gt_itemsize = jnp.dtype(gt3.dtype).itemsize
        gt_row_bytes = 128 * gt_itemsize
    else:
        gt3 = gt.reshape(B, C, N)
        gt_itemsize = jnp.dtype(gt3.dtype).itemsize
        gt_row_bytes = 128 * C * gt_itemsize

    l_itemsize = jnp.dtype(logit3.dtype).itemsize
    chunk = max(_sublane_align(l_itemsize), _sublane_align(gt_itemsize))

    # Pad only up to the chunk*128 boundary (reshape is free when N already
    # is a multiple); ragged spatial tiles handle everything beyond.
    pad_to = chunk * 128
    n_pad = -(-N // pad_to) * pad_to
    if n_pad != N:
        logit3 = jnp.pad(logit3, ((0, 0), (0, 0), (0, n_pad - N)))
        if from_labels:
            gt3 = jnp.pad(gt3, ((0, 0), (0, n_pad - N)), constant_values=-1)
        else:
            gt3 = jnp.pad(gt3, ((0, 0), (0, 0), (0, n_pad - N)))
    nt = n_pad // 128

    logit4 = logit3.reshape(B, C, nt, 128)
    gt_in = gt3.reshape(B, nt, 128) if from_labels else gt3.reshape(B, C, nt, 128)

    # --- spatial tile rows from the per-TensorCore VMEM budget -------------
    vmem_cap = _vmem_per_core_bytes()
    vmem_limit = min(vmem_cap * 3 // 4, 96 << 20)
    usable = vmem_limit - (8 << 20)            # accumulators, chunk temps, misc
    row_bytes = 128 * C * l_itemsize + gt_row_bytes
    tnt = min(2048, usable // (2 * row_bytes))  # 2x = double-buffered inputs
    tnt = max(chunk, (tnt // chunk) * chunk)
    if max_tile_rows is not None:
        tnt = min(tnt, max(chunk, (int(max_tile_rows) // chunk) * chunk))
    tnt = min(tnt, nt)

    num_tiles = -(-nt // tnt)
    rem_rows = nt - (num_tiles - 1) * tnt
    full_chunks = tnt // chunk
    last_chunks = rem_rows // chunk

    # Split spatial tiles when B is small/odd so both TensorCores of a
    # megacore chip get work (cheap no-op elsewhere).
    n_splits = 2 if (B % 2 == 1 and B < 8 and num_tiles >= 2) else 1
    tiles_per_split = -(-num_tiles // n_splits)
    has_phantom = n_splits * tiles_per_split != num_tiles

    need_tail_mask = bool(per_channel and (n_pad != N))
    uniform = (not has_phantom) and (last_chunks == full_chunks) and (not need_tail_mask)
    n_valid_last_tile = N - (num_tiles - 1) * tnt * 128

    def logit_idx(b, p, s):
        t = jnp.minimum(p * tiles_per_split + s, num_tiles - 1)
        return (b, 0, t, 0)

    if from_labels:
        def gt_idx(b, p, s):
            t = jnp.minimum(p * tiles_per_split + s, num_tiles - 1)
            return (b, t, 0)
        gt_spec = pl.BlockSpec((1, tnt, 128), gt_idx)
    else:
        def gt_idx(b, p, s):
            t = jnp.minimum(p * tiles_per_split + s, num_tiles - 1)
            return (b, 0, t, 0)
        gt_spec = pl.BlockSpec((1, C, tnt, 128), gt_idx)

    logit_spec = pl.BlockSpec((1, C, tnt, 128), logit_idx)

    if per_channel:
        n_out = 3
        acc_shape = jax.ShapeDtypeStruct((B * n_splits, C, 8, 128), jnp.float32)
        acc_spec = pl.BlockSpec((1, C, 8, 128),
                                lambda b, p, s: (b * n_splits + p, 0, 0, 0))
    else:
        n_out = 2
        acc_shape = jax.ShapeDtypeStruct((B * n_splits, 8, 128), jnp.float32)
        acc_spec = pl.BlockSpec((1, 8, 128),
                                lambda b, p, s: (b * n_splits + p, 0, 0))

    kernel = functools.partial(
        _iou_partials_kernel,
        chunk=chunk, full_chunks=full_chunks, last_chunks=last_chunks,
        num_tiles=num_tiles, tiles_per_split=tiles_per_split,
        per_channel=per_channel, from_labels=from_labels,
        uniform=uniform, need_tail_mask=need_tail_mask,
        n_valid_last_tile=n_valid_last_tile)

    outs = pl.pallas_call(
        kernel,
        out_shape=[acc_shape] * n_out,
        grid=(B, n_splits, tiles_per_split),
        in_specs=[logit_spec, gt_spec],
        out_specs=[acc_spec] * n_out,
        compiler_params=pltpu.CompilerParams(
            dimension_semantics=("parallel", "parallel", "arbitrary"),
            vmem_limit_bytes=int(vmem_limit)),
    )(logit4, gt_in)

    if per_channel:
        red = lambda o: o.reshape(B, n_splits, C, 8, 128).sum(axis=(1, 3, 4))  # (B,C)
    else:
        red = lambda o: o.reshape(B, n_splits, 8, 128).sum(axis=(1, 2, 3))     # (B,)
    return tuple(red(o) for o in outs), N


def _loss_from_sums(sums, N, C, ignore_label, smooth, reduction):
    if ignore_label is None:
        tp, sg = sums
        fn = sg - tp
        fp = jnp.float32(N) - tp        # softmax: sum_c pred == 1 per position
    else:
        tp_bc, sg_bc, sp_bc = sums
        keep = [c for c in range(C) if c != ignore_label]
        tp = tp_bc[:, keep].sum(axis=0)
        fp = sp_bc[:, keep].sum(axis=0) - tp
        fn = sg_bc[:, keep].sum(axis=0) - tp
    iou = (tp + smooth) / (tp + fp + fn + EPS + smooth)
    loss = 1.0 - iou
    if reduction == "mean":
        return jnp.mean(loss)
    if reduction == "none":
        return loss
    raise ValueError(f"Unrecognized reduction method ({reduction}).")


def iou_loss_pallas(logit, gt, *, ignore_label=None, smooth=SMOOTH,
                    reduction="mean", downcast_gt=True, max_tile_rows=None):
    """Dense one-hot gt path. logit, gt: (B, C, *spatial)."""
    assert logit.shape == gt.shape
    # One-hot/binary gt is exact in bf16; halving its HBM stream matters since
    # the kernel is bandwidth bound (XLA fuses the cast into gt's producer in
    # the common case where gt was just built on-device).
    if downcast_gt and jnp.issubdtype(gt.dtype, jnp.floating) \
            and jnp.dtype(gt.dtype).itemsize >= 4:
        gt = gt.astype(jnp.bfloat16)
    per_channel = ignore_label is not None
    sums, N = _iou_partial_sums(logit, gt, from_labels=False,
                                per_channel=per_channel,
                                max_tile_rows=max_tile_rows)
    return _loss_from_sums(sums, N, int(logit.shape[1]), ignore_label,
                           smooth, reduction)


def iou_loss_pallas_from_labels(logit, labels, *, ignore_label=None, smooth=SMOOTH,
                                reduction="mean", max_tile_rows=None):
    """Fast path: integer class-id map labels (B, *spatial) instead of a dense
    one-hot gt tensor — cuts the gt HBM stream by ~C x."""
    assert labels.shape == logit.shape[:1] + logit.shape[2:]
    per_channel = ignore_label is not None
    sums, N = _iou_partial_sums(logit, labels, from_labels=True,
                                per_channel=per_channel,
                                max_tile_rows=max_tile_rows)
    return _loss_from_sums(sums, N, int(logit.shape[1]), ignore_label,
                           smooth, reduction)


def _iou_loss_ref(logit, gt, *, smooth=SMOOTH, ignore_label=None, reduction="mean"):
    """Pure-JAX reference mirroring the PyTorch module (incl. ignore_label quirk)."""
    pred = jax.nn.softmax(logit.astype(jnp.float32), axis=1)
    g = gt.astype(jnp.float32)
    if ignore_label is not None:
        keep = [i for i in range(pred.shape[1]) if i != ignore_label]
        pred = jnp.stack([pred[:, i] for i in keep], axis=0)
        g = jnp.stack([g[:, i] for i in keep], axis=0)
    p = pred.reshape(pred.shape[0], -1)
    gg = g.reshape(g.shape[0], -1)
    tp = jnp.sum(p * gg, axis=-1)
    fp = jnp.sum(p * (1.0 - gg), axis=-1)
    fn = jnp.sum((1.0 - p) * gg, axis=-1)
    iou = (tp + smooth) / (tp + fp + fn + EPS + smooth)
    loss = 1.0 - iou
    return jnp.mean(loss) if reduction == "mean" else loss


if __name__ == "__main__":
    key = jax.random.PRNGKey(0)
    k1, k2, k3, k4 = jax.random.split(key, 4)

    # approx=True reciprocal (~2^-12 rel err) -> loss-appropriate tolerance.
    TOL = dict(atol=1e-3, rtol=1e-3)

    # --- small NCHW case ----------------------------------------------------
    B, C, H, W = 2, 4, 16, 16
    logit = jax.random.normal(k1, (B, C, H, W), dtype=jnp.float32)
    labels = jax.random.randint(k2, (B, H, W), 0, C)
    gt = jnp.transpose(jax.nn.one_hot(labels, C, dtype=jnp.float32), (0, 3, 1, 2))

    out = jax.block_until_ready(iou_loss_pallas(logit, gt, reduction="mean"))
    ref = _iou_loss_ref(logit, gt, reduction="mean")
    assert jnp.allclose(out, ref, **TOL), (out, ref)

    out_n = jax.block_until_ready(iou_loss_pallas(logit, gt, reduction="none"))
    ref_n = _iou_loss_ref(logit, gt, reduction="none")
    assert jnp.allclose(out_n, ref_n, **TOL), (out_n, ref_n)

    out_i = jax.block_until_ready(
        iou_loss_pallas(logit, gt, ignore_label=0, reduction="mean"))
    ref_i = _iou_loss_ref(logit, gt, ignore_label=0, reduction="mean")
    assert jnp.allclose(out_i, ref_i, **TOL), (out_i, ref_i)

    # --- label-map fast path (no dense gt tensor in HBM) --------------------
    out_l = jax.block_until_ready(
        iou_loss_pallas_from_labels(logit, labels, reduction="mean"))
    assert jnp.allclose(out_l, ref, **TOL), (out_l, ref)

    out_li = jax.block_until_ready(
        iou_loss_pallas_from_labels(logit, labels, ignore_label=0, reduction="mean"))
    assert jnp.allclose(out_li, ref_i, **TOL), (out_li, ref_i)

    # --- B=1: exercises the two-way spatial split (both TensorCores), the
    #     ragged last tile and the phantom-tile skip --------------------------
    B2, C2, H2, W2 = 1, 3, 64, 70
    logit2 = jax.random.normal(k3, (B2, C2, H2, W2), dtype=jnp.float32)
    labels2 = jax.random.randint(k4, (B2, H2, W2), 0, C2)
    gt2 = jnp.transpose(jax.nn.one_hot(labels2, C2, dtype=jnp.float32), (0, 3, 1, 2))

    out2 = jax.block_until_ready(
        iou_loss_pallas(logit2, gt2, reduction="mean",
                        downcast_gt=False, max_tile_rows=16))
    ref2 = _iou_loss_ref(logit2, gt2, reduction="mean")
    assert jnp.allclose(out2, ref2, **TOL), (out2, ref2)

    out2i = jax.block_until_ready(
        iou_loss_pallas(logit2, gt2, ignore_label=1, reduction="none",
                        max_tile_rows=16))
    ref2i = _iou_loss_ref(logit2, gt2, ignore_label=1, reduction="none")
    assert jnp.allclose(out2i, ref2i, **TOL), (out2i, ref2i)

    print("KERNEL_OK")
</pallas_src>

<mosaic_0001>
module attributes {stable_mosaic.version = 11 : i64} {
  func.func @_iou_partials_kernel(%arg0: i32, %arg1: i32, %arg2: i32, %arg3: memref<1x4x16x128xf32, #tpu.memory_space<vmem>>, %arg4: memref<1x4x16x128xbf16, #tpu.memory_space<vmem>>, %arg5: memref<1x8x128xf32, #tpu.memory_space<vmem>>, %arg6: memref<1x8x128xf32, #tpu.memory_space<vmem>>) attributes {dimension_semantics = [#tpu.dimension_semantics<parallel>, #tpu.dimension_semantics<parallel>, #tpu.dimension_semantics<arbitrary>], iteration_bounds = array<i64: 2, 1, 1>, scalar_prefetch = 0 : i64, scratch_operands = 0 : i64, tpu.core_type = #tpu.core_type<tc>, window_params = [{transform_indices = @transform_0, window_bounds = array<i64: 1, 4, 16, 128>}, {transform_indices = @transform_1, window_bounds = array<i64: 1, 4, 16, 128>}, {transform_indices = @transform_2, window_bounds = array<i64: 1, 8, 128>}, {transform_indices = @transform_3, window_bounds = array<i64: 1, 8, 128>}]} {
    %c0_i32 = arith.constant 0 : i32
    %0 = arith.cmpi eq, %arg2, %c0_i32 : i32
    %1 = arith.extui %0 : i1 to i32
    %c0_i32_0 = arith.constant 0 : i32
    %2 = arith.cmpi ne, %1, %c0_i32_0 : i32
    scf.if %2 {
      %cst_27 = arith.constant 0.000000e+00 : f32
      %35 = vector.broadcast %cst_27 : f32 to vector<1x8x128xf32>
      %c0_28 = arith.constant 0 : index
      %c0_29 = arith.constant 0 : index
      %c0_30 = arith.constant 0 : index
      %36 = vector.load %arg5[%c0_28, %c0_29, %c0_30] : memref<1x8x128xf32, #tpu.memory_space<vmem>>, vector<1x8x128xf32>
      tpu.vector_store %arg5[%c0_28, %c0_29, %c0_30], %35 {strides = array<i32>} : memref<1x8x128xf32, #tpu.memory_space<vmem>>, vector<1x8x128xf32>,
      %cst_31 = arith.constant 0.000000e+00 : f32
      %37 = vector.broadcast %cst_31 : f32 to vector<1x8x128xf32>
      %c0_32 = arith.constant 0 : index
      %c0_33 = arith.constant 0 : index
      %c0_34 = arith.constant 0 : index
      %38 = vector.load %arg6[%c0_32, %c0_33, %c0_34] : memref<1x8x128xf32, #tpu.memory_space<vmem>>, vector<1x8x128xf32>
      tpu.vector_store %arg6[%c0_32, %c0_33, %c0_34], %37 {strides = array<i32>} : memref<1x8x128xf32, #tpu.memory_space<vmem>>, vector<1x8x128xf32>,
    } else {
    }
    %cst = arith.constant 0.000000e+00 : f32
    %3 = vector.broadcast %cst : f32 to vector<8x128xf32>
    %cst_1 = arith.constant 0.000000e+00 : f32
    %4 = vector.broadcast %cst_1 : f32 to vector<8x128xf32>
    %c0 = arith.constant 0 : index
    %c0_2 = arith.constant 0 : index
    %c0_3 = arith.constant 0 : index
    %c0_4 = arith.constant 0 : index
    %5 = vector.load %arg3[%c0, %c0_2, %c0_3, %c0_4] : memref<1x4x16x128xf32, #tpu.memory_space<vmem>>, vector<1x4x16x128xf32>
    %6 = vector.shape_cast %5 : vector<1x4x16x128xf32> to vector<4x16x128xf32>
    %cst_5 = arith.constant dense<0xFF800000> : vector<16x128xf32>
    %7 = vector.multi_reduction <maximumf>, %6, %cst_5 [0] : vector<4x16x128xf32> to vector<16x128xf32>
    %8 = vector.shape_cast %7 : vector<16x128xf32> to vector<1x16x128xf32>
    %9 = vector.broadcast %8 : vector<1x16x128xf32> to vector<4x16x128xf32>
    %10 = arith.subf %6, %9 : vector<4x16x128xf32>
    %11 = math.exp %10 : vector<4x16x128xf32>
    %cst_6 = arith.constant dense<0.000000e+00> : vector<16x128xf32>
    %12 = vector.multi_reduction <add>, %11, %cst_6 [0] : vector<4x16x128xf32> to vector<16x128xf32>
    %13 = tpu.reciprocal %12 {approx = true} : vector<16x128xf32> -> vector<16x128xf32>
    %c0_7 = arith.constant 0 : index
    %c0_8 = arith.constant 0 : index
    %c0_9 = arith.constant 0 : index
    %c0_10 = arith.constant 0 : index
    %14 = vector.load %arg4[%c0_7, %c0_8, %c0_9, %c0_10] : memref<1x4x16x128xbf16, #tpu.memory_space<vmem>>, vector<1x4x16x128xbf16>
    %15 = vector.shape_cast %14 : vector<1x4x16x128xbf16> to vector<4x16x128xbf16>
    %16 = arith.extf %15 : vector<4x16x128xbf16> to vector<4x16x128xf32>
    %17 = arith.mulf %11, %16 : vector<4x16x128xf32>
    %cst_11 = arith.constant dense<0.000000e+00> : vector<16x128xf32>
    %18 = vector.multi_reduction <add>, %17, %cst_11 [0] : vector<4x16x128xf32> to vector<16x128xf32>
    %19 = arith.mulf %18, %13 : vector<16x128xf32>
    %cst_12 = arith.constant dense<0.000000e+00> : vector<16x128xf32>
    %20 = vector.multi_reduction <add>, %16, %cst_12 [0] : vector<4x16x128xf32> to vector<16x128xf32>
    %21 = vector.shape_cast %19 : vector<16x128xf32> to vector<2x8x128xf32>
    %cst_13 = arith.constant dense<0.000000e+00> : vector<8x128xf32>
    %22 = vector.multi_reduction <add>, %21, %cst_13 [0] : vector<2x8x128xf32> to vector<8x128xf32>
    %23 = arith.addf %3, %22 : vector<8x128xf32>
    %24 = vector.shape_cast %20 : vector<16x128xf32> to vector<2x8x128xf32>
    %cst_14 = arith.constant dense<0.000000e+00> : vector<8x128xf32>
    %25 = vector.multi_reduction <add>, %24, %cst_14 [0] : vector<2x8x128xf32> to vector<8x128xf32>
    %26 = arith.addf %4, %25 : vector<8x128xf32>
    %c0_15 = arith.constant 0 : index
    %c0_16 = arith.constant 0 : index
    %c0_17 = arith.constant 0 : index
    %27 = vector.load %arg5[%c0_15, %c0_16, %c0_17] : memref<1x8x128xf32, #tpu.memory_space<vmem>>, vector<1x8x128xf32>
    %28 = vector.shape_cast %23 : vector<8x128xf32> to vector<1x8x128xf32>
    %29 = arith.addf %27, %28 : vector<1x8x128xf32>
    %c0_18 = arith.constant 0 : index
    %c0_19 = arith.constant 0 : index
    %c0_20 = arith.constant 0 : index
    %30 = vector.load %arg5[%c0_18, %c0_19, %c0_20] : memref<1x8x128xf32, #tpu.memory_space<vmem>>, vector<1x8x128xf32>
    tpu.vector_store %arg5[%c0_18, %c0_19, %c0_20], %29 {strides = array<i32>} : memref<1x8x128xf32, #tpu.memory_space<vmem>>, vector<1x8x128xf32>,
    %c0_21 = arith.constant 0 : index
    %c0_22 = arith.constant 0 : index
    %c0_23 = arith.constant 0 : index
    %31 = vector.load %arg6[%c0_21, %c0_22, %c0_23] : memref<1x8x128xf32, #tpu.memory_space<vmem>>, vector<1x8x128xf32>
    %32 = vector.shape_cast %26 : vector<8x128xf32> to vector<1x8x128xf32>
    %33 = arith.addf %31, %32 : vector<1x8x128xf32>
    %c0_24 = arith.constant 0 : index
    %c0_25 = arith.constant 0 : index
    %c0_26 = arith.constant 0 : index
    %34 = vector.load %arg6[%c0_24, %c0_25, %c0_26] : memref<1x8x128xf32, #tpu.memory_space<vmem>>, vector<1x8x128xf32>
    tpu.vector_store %arg6[%c0_24, %c0_25, %c0_26], %33 {strides = array<i32>} : memref<1x8x128xf32, #tpu.memory_space<vmem>>, vector<1x8x128xf32>,
    return
  }
  func.func @transform_0(%arg0: i32, %arg1: i32, %arg2: i32) -> (i32, i32, i32, i32) {
    %c1_i32 = arith.constant 1 : i32
    %0 = arith.muli %arg1, %c1_i32 : i32
    %1 = arith.addi %0, %arg2 : i32
    %c0_i32 = arith.constant 0 : i32
    %2 = arith.minsi %1, %c0_i32 : i32
    %c0_i32_0 = arith.constant 0 : i32
    %c0_i32_1 = arith.constant 0 : i32
    %c0_i32_2 = arith.constant 0 : i32
    return %arg0, %c0_i32_0, %2, %c0_i32_1 : i32, i32, i32, i32
  }
  func.func @transform_1(%arg0: i32, %arg1: i32, %arg2: i32) -> (i32, i32, i32, i32) {
    %c1_i32 = arith.constant 1 : i32
    %0 = arith.muli %arg1, %c1_i32 : i32
    %1 = arith.addi %0, %arg2 : i32
    %c0_i32 = arith.constant 0 : i32
    %2 = arith.minsi %1, %c0_i32 : i32
    %c0_i32_0 = arith.constant 0 : i32
    %c0_i32_1 = arith.constant 0 : i32
    %c0_i32_2 = arith.constant 0 : i32
    return %arg0, %c0_i32_0, %2, %c0_i32_1 : i32, i32, i32, i32
  }
  func.func @transform_2(%arg0: i32, %arg1: i32, %arg2: i32) -> (i32, i32, i32) {
    %c1_i32 = arith.constant 1 : i32
    %0 = arith.muli %arg0, %c1_i32 : i32
    %1 = arith.addi %0, %arg1 : i32
    %c0_i32 = arith.constant 0 : i32
    %c0_i32_0 = arith.constant 0 : i32
    %c0_i32_1 = arith.constant 0 : i32
    return %1, %c0_i32, %c0_i32_0 : i32, i32, i32
  }
  func.func @transform_3(%arg0: i32, %arg1: i32, %arg2: i32) -> (i32, i32, i32) {
    %c1_i32 = arith.constant 1 : i32
    %0 = arith.muli %arg0, %c1_i32 : i32
    %1 = arith.addi %0, %arg1 : i32
    %c0_i32 = arith.constant 0 : i32
    %c0_i32_0 = arith.constant 0 : i32
    %c0_i32_1 = arith.constant 0 : i32
    return %1, %c0_i32, %c0_i32_0 : i32, i32, i32
  }
}

</mosaic_0001>

<llo_original>
// kernel: tpu_custom_call.1
$region0: #{tpu_custom_call.1}
  #allocation0 [shape = 'u32[]', space=smem, size = 0x4, offset = 0x4, fixed_abs, tag = 'smem constant byte address 0x4 - core index']
  #allocation1 [shape = 'u32[72,128]{1,0:T(1,128)}', space=vmem, size = 0x9000, scoped, tag = 'internal scratch']
  %s0 = inlined_call_operand.hbm [shape: f32[2,4,16,128], index: 0, kind: input, shape index: {}]
  %s1 = inlined_call_operand.hbm [shape: bf16[2,4,16,128], index: 1, kind: input, shape index: {}]
  %s2 = inlined_call_operand.hbm [shape: f32[2,8,128], index: 2, kind: output, shape index: {0}]
  %s3 = inlined_call_operand.hbm [shape: f32[2,8,128], index: 3, kind: output, shape index: {1}]
  %4 = xla_tuple %s2, %s3
  %s5 = sld [smem:[#allocation0]]
  $region61: #{tpu_custom_call.1} parent=0
    _
  %s7 = ssub.s32 1, %s5
  %s8 = scalar_select 0, %s7, %s5
  $region1: #{tpu_custom_call.1} parent=0
    #allocation2 [shape = 'u8[65536]{0}', space=vmem, size = 0x10000, scoped, tag = 'input window, operand 0']
    #allocation3 [shape = 's32[2]{0}', space=sflag, size = 0x8, scoped, tag = 'scoped memory for tpu_custom_call.1']
    #allocation4 [shape = 's32[2]{0}', space=sflag, size = 0x8, scoped, tag = 'scoped memory for tpu_custom_call.1']
    #allocation5 [shape = 'u8[32768]{0}', space=vmem, size = 0x8000, scoped, tag = 'input window, operand 1']
    #allocation6 [shape = 's32[2]{0}', space=sflag, size = 0x8, scoped, tag = 'scoped memory for tpu_custom_call.1']
    #allocation7 [shape = 'u8[8192]{0}', space=vmem, size = 0x2000, scoped, tag = 'output window, operand 0']
    #allocation8 [shape = 'u8[8192]{0}', space=vmem, size = 0x2000, scoped, tag = 'output window, operand 1']
    #allocation9 [shape = 's32[2]{0}', space=sflag, size = 0x8, scoped, tag = 'scoped memory for tpu_custom_call.1']
    %9 = vsyncpa [#allocation3], 0
    %s10 = scalar_lea.sflag [#allocation3], 1
    %11 = vsyncpa %s10, 0
    %12 = vsyncpa [#allocation6], 0
    %s13 = scalar_lea.sflag [#allocation6], 1
    %14 = vsyncpa %s13, 0
    %15 = vsyncpa [#allocation4], 0
    %s16 = scalar_lea.sflag [#allocation4], 1
    %17 = vsyncpa %s16, 0
    %18 = vsyncpa [#allocation9], 0
    %s19 = scalar_lea.sflag [#allocation9], 1
    %20 = vsyncpa %s19, 0
    loop: start=0, step=1, limit=4
    $region2: #{tpu_custom_call.1} parent=1 // loop_pre_header
      _
    $region3: #{tpu_custom_call.1} parent=1 // loop_header
      %s22 = sphi 0, %s26
      %p23 = scmp.ge.s32.totalorder %s22, 4
      %s29 = sphi 0, %s48
      %s30 = sphi 0, %s44
      %s31 = sphi 0, %s40
      %s32 = sphi 0, %s29
      %s33 = sphi 0, %s30
      %s34 = sphi 0, %s31
      %s35 = sphi 0, %s32
      %s36 = sphi 0, %s33
      %s37 = sphi 0, %s34
      %s59 = sphi 0, %s61
      %s62 = sphi 0, %s59
      %s63 = sphi 0, %s62
      %s79 = sphi 0, %s63
      %s93 = sphi 0, %s95
      %s96 = sphi 0, %s93
      %s97 = sphi 0, %s96
      %s113 = sphi 0, %s97
      %s121 = sphi 0, %s123
      %s124 = sphi 0, %s121
      %s125 = sphi 0, %s124
      %s141 = sphi 0, %s125
      %s149 = sphi 0, %s151
      %s152 = sphi 0, %s149
      %s153 = sphi 0, %s152
      %s169 = sphi 0, %s153
    $region4: #{tpu_custom_call.1} parent=1 // loop_header_branch
      %25 = sbr.rel (%p23) target = $region8
    $region5: #{tpu_custom_call.1} parent=1 // loop_body
      %s27 = ssub.s32 %s22, 1
      %s28 = ssub.s32 %s22, 2
      %s38 = sadd.s32 1, %s31
      %p39 = scmp.ge.s32.totalorder %s38, 1
      %s40 = scalar_select %p39, 0, %s38
      %s41 = sadd.s32 1, %s30
      %s42 = scalar_select %p39, %s41, %s30
      %p43 = scmp.ge.s32.totalorder %s42, 1
      %s44 = scalar_select %p43, 0, %s42
      %s45 = sadd.s32 1, %s29
      %s46 = scalar_select %p43, %s45, %s29
      %p47 = scmp.ge.s32.totalorder %s46, 2
      %s48 = scalar_select %p47, 0, %s46
      %s49 = sadd.s32 %s30, %s31
      %p50 = scmp.lt.s32.totalorder %s49, 0
      %s51 = scalar_select %p50, %s49, 0
      %s52 = sadd.s32 %s44, %s40
      %p53 = scmp.lt.s32.totalorder %s52, 0
      %s54 = scalar_select %p53, %s52, 0
      %s55 = ssub.s32 %s29, %s48
      %s56 = ssub.s32 %s51, %s54
      %s57 = sor.u32 %s55, %s56
      %p58 = scmp.eq.s32.totalorder %s57, 0
      %s60 = sadd.s32 %s59, 1
      %s61 = scalar_select %p58, %s59, %s60
      %p64 = pneg %p58
      %p65 = scmp.eq.s32.totalorder %s22, 1
      %p66 = por %p64, %p65
      %p67 = scmp.ne.s32.totalorder %s59, %s62
      %p68 = scmp.eq.s32.totalorder %s22, 0
      %p69 = por %p67, %p68
      %p70 = scmp.ne.s32.totalorder %s59, %s62
      %p71 = scmp.eq.s32.totalorder %s27, 1
      %p72 = por %p70, %p71
      %p73 = scmp.ne.s32.totalorder %s62, %s63
      %p74 = scmp.eq.s32.totalorder %s27, 0
      %p75 = por %p73, %p74
      %p76 = scmp.ne.s32.totalorder %s62, %s63
      %p77 = scmp.eq.s32.totalorder %s28, 1
      %p78 = por %p76, %p77
      %p80 = scmp.ne.s32.totalorder %s63, %s79
      %p81 = scmp.eq.s32.totalorder %s28, 0
      %p82 = por %p80, %p81
      %s83 = sadd.s32 %s30, %s31
      %p84 = scmp.lt.s32.totalorder %s83, 0
      %s85 = scalar_select %p84, %s83, 0
      %s86 = sadd.s32 %s44, %s40
      %p87 = scmp.lt.s32.totalorder %s86, 0
      %s88 = scalar_select %p87, %s86, 0
      %s89 = ssub.s32 %s29, %s48
      %s90 = ssub.s32 %s85, %s88
      %s91 = sor.u32 %s89, %s90
      %p92 = scmp.eq.s32.totalorder %s91, 0
      %s94 = sadd.s32 %s93, 1
      %s95 = scalar_select %p92, %s93, %s94
      %p98 = pneg %p92
      %p99 = scmp.eq.s32.totalorder %s22, 1
      %p100 = por %p98, %p99
      %p101 = scmp.ne.s32.totalorder %s93, %s96
      %p102 = scmp.eq.s32.totalorder %s22, 0
      %p103 = por %p101, %p102
      %p104 = scmp.ne.s32.totalorder %s93, %s96
      %p105 = scmp.eq.s32.totalorder %s27, 1
      %p106 = por %p104, %p105
      %p107 = scmp.ne.s32.totalorder %s96, %s97
      %p108 = scmp.eq.s32.totalorder %s27, 0
      %p109 = por %p107, %p108
      %p110 = scmp.ne.s32.totalorder %s96, %s97
      %p111 = scmp.eq.s32.totalorder %s28, 1
      %p112 = por %p110, %p111
      %p114 = scmp.ne.s32.totalorder %s97, %s113
      %p115 = scmp.eq.s32.totalorder %s28, 0
      %p116 = por %p114, %p115
      %s117 = sadd.s32 %s29, %s30
      %s118 = sadd.s32 %s48, %s44
      %s119 = ssub.s32 %s117, %s118
      %p120 = scmp.eq.s32.totalorder %s119, 0
      %s122 = sadd.s32 %s121, 1
      %s123 = scalar_select %p120, %s121, %s122
      %p126 = pneg %p120
      %p127 = scmp.eq.s32.totalorder %s22, 1
      %p128 = por %p126, %p127
      %p129 = scmp.ne.s32.totalorder %s121, %s124
      %p130 = scmp.eq.s32.totalorder %s22, 0
      %p131 = por %p129, %p130
      %p132 = scmp.ne.s32.totalorder %s121, %s124
      %p133 = scmp.eq.s32.totalorder %s27, 1
      %p134 = por %p132, %p133
      %p135 = scmp.ne.s32.totalorder %s124, %s125
      %p136 = scmp.eq.s32.totalorder %s27, 0
      %p137 = por %p135, %p136
      %p138 = scmp.ne.s32.totalorder %s124, %s125
      %p139 = scmp.eq.s32.totalorder %s28, 1
      %p140 = por %p138, %p139
      %p142 = scmp.ne.s32.totalorder %s125, %s141
      %p143 = scmp.eq.s32.totalorder %s28, 0
      %p144 = por %p142, %p143
      %s145 = sadd.s32 %s29, %s30
      %s146 = sadd.s32 %s48, %s44
      %s147 = ssub.s32 %s145, %s146
      %p148 = scmp.eq.s32.totalorder %s147, 0
      %s150 = sadd.s32 %s149, 1
      %s151 = scalar_select %p148, %s149, %s150
      %p154 = pneg %p148
      %p155 = scmp.eq.s32.totalorder %s22, 1
      %p156 = por %p154, %p155
      %p157 = scmp.ne.s32.totalorder %s149, %s152
      %p158 = scmp.eq.s32.totalorder %s22, 0
      %p159 = por %p157, %p158
      %p160 = scmp.ne.s32.totalorder %s149, %s152
      %p161 = scmp.eq.s32.totalorder %s27, 1
      %p162 = por %p160, %p161
      %p163 = scmp.ne.s32.totalorder %s152, %s153
      %p164 = scmp.eq.s32.totalorder %s27, 0
      %p165 = por %p163, %p164
      %p166 = scmp.ne.s32.totalorder %s152, %s153
      %p167 = scmp.eq.s32.totalorder %s28, 1
      %p168 = por %p166, %p167
      %p170 = scmp.ne.s32.totalorder %s153, %s169
      %p171 = scmp.eq.s32.totalorder %s28, 0
      %p172 = por %p170, %p171
      %p173 = scmp.le.s32.totalorder 1, %s22
      %p174 = scmp.lt.s32.totalorder %s22, 3
      %p175 = pnand %p173, %p174
      %p176 = pneg %p175
      // Predicated region
      $region9: #{tpu_custom_call.1} parent=5 // pred_check
        _
      $region10: #{tpu_custom_call.1} parent=5 // pred_check_branch
        %178 = sbr.rel (%p175) target = $region12
      $region11: #{tpu_custom_call.1} parent=5 // pred_region
        %s179 = ssub.s32 %s22, 1
      $region12: #{tpu_custom_call.1} parent=5 // pred_fallthru
        _
      %p180 = scmp.lt.s32.totalorder %s22, 2
      // Predicated region
      $region13: #{tpu_custom_call.1} parent=5 // pred_check
        %p181 = pneg %p180
      $region14: #{tpu_custom_call.1} parent=5 // pred_check_branch
        %183 = sbr.rel (%p181) target = $region16
      $region15: #{tpu_custom_call.1} parent=5 // pred_region
        // Predicated region
        $region17: #{tpu_custom_call.1} parent=15 // pred_check
          %p184 = pneg %p69
        $region18: #{tpu_custom_call.1} parent=15 // pred_check_branch
          %186 = sbr.rel (%p184) target = $region20
        $region19: #{tpu_custom_call.1} parent=15 // pred_region
          %s187 = sand.u32 %s59, 1
          %s188 = scalar_lea.sflag [#allocation3], %s187
          %s189 = sand.u32 %s59, 1
          %s190 = smul.addr %s189, 64
          %s191 = scalar_lea.vmem [#allocation2], %s190
          %s192 = sadd.s32 %s30, %s31
          %p193 = scmp.lt.s32.totalorder %s192, 0
          %s194 = scalar_select %p193, %s192, 0
          %s195 = smul.u32 2, %s194
          %197 = vsyncadd %s188, 0
          %s198 = smul.addr %s29, 8
          %s199 = sadd.s32 %s195, %s198
          %s200 = smul.addr %s199, 8
          %s201 = scalar_lea.hbm %s0, %s200
          %s202 = sshll.u32 %s201, 4
          %s203 = int_to_ptr.hbm [resolvable:$true] %s202
          %s204 = sshll.u32 %s191, 4
          %s205 = int_to_ptr.vmem [resolvable:$true] %s204
          %210 = dma.hbm_to_vmem [thread:$0]  %s203, 1024, %s205, %s188, 128, 128, 8
        $region20: #{tpu_custom_call.1} parent=15 // pred_fallthru
          _
        // Predicated region
        $region21: #{tpu_custom_call.1} parent=15 // pred_check
          %p211 = pneg %p103
        $region22: #{tpu_custom_call.1} parent=15 // pred_check_branch
          %213 = sbr.rel (%p211) target = $region24
        $region23: #{tpu_custom_call.1} parent=15 // pred_region
          %s214 = sand.u32 %s93, 1
          %s215 = scalar_lea.sflag [#allocation6], %s214
          %s216 = sand.u32 %s93, 1
          %s217 = smul.addr %s216, 32
          %s218 = scalar_lea.vmem [#allocation5], %s217
          %s219 = sadd.s32 %s30, %s31
          %p220 = scmp.lt.s32.totalorder %s219, 0
          %s221 = scalar_select %p220, %s219, 0
          %s222 = smul.u32 2, %s221
          %224 = vsyncadd %s215, 0
          %s225 = smul.addr %s29, 8
          %s226 = sadd.s32 %s222, %s225
          %s227 = smul.addr %s226, 4
          %s228 = scalar_lea.hbm %s1, %s227
          %s229 = sshll.u32 %s228, 4
          %s230 = int_to_ptr.hbm [resolvable:$true] %s229
          %s231 = sshll.u32 %s218, 4
          %s232 = int_to_ptr.vmem [resolvable:$true] %s231
          %237 = dma.hbm_to_vmem [thread:$0]  %s230, 512, %s232, %s215, 64, 64, 4
        $region24: #{tpu_custom_call.1} parent=15 // pred_fallthru
          _
      $region16: #{tpu_custom_call.1} parent=5 // pred_fallthru
        _
      %p238 = scmp.le.s32.totalorder 1, %s22
      %p239 = scmp.lt.s32.totalorder %s22, 3
      %p240 = pnand %p238, %p239
      %p241 = pneg %p240
      // Predicated region
      $region25: #{tpu_custom_call.1} parent=5 // pred_check
        _
      $region26: #{tpu_custom_call.1} parent=5 // pred_check_branch
        %243 = sbr.rel (%p240) target = $region28
      $region27: #{tpu_custom_call.1} parent=5 // pred_region
        %s244 = ssub.s32 %s22, 1
        %s245 = sand.u32 %s62, 1
        %s246 = scalar_lea.sflag [#allocation3], %s245
        %s247 = sand.u32 %s62, 1
        %s248 = smul.addr %s247, 64
        %s249 = scalar_lea.vmem [#allocation2], %s248
        // Predicated region
        $region29: #{tpu_custom_call.1} parent=27 // pred_check
          %p250 = pneg %p75
        $region30: #{tpu_custom_call.1} parent=27 // pred_check_branch
          %252 = sbr.rel (%p250) target = $region32
        $region31: #{tpu_custom_call.1} parent=27 // pred_region
          %254 = dma.done %s246, 1024
        $region32: #{tpu_custom_call.1} parent=27 // pred_fallthru
          _
        %s255 = sand.u32 %s96, 1
        %s256 = scalar_lea.sflag [#allocation6], %s255
        %s257 = sand.u32 %s96, 1
        %s258 = smul.addr %s257, 32
        %s259 = scalar_lea.vmem [#allocation5], %s258
        // Predicated region
        $region33: #{tpu_custom_call.1} parent=27 // pred_check
          %p260 = pneg %p109
        $region34: #{tpu_custom_call.1} parent=27 // pred_check_branch
          %262 = sbr.rel (%p260) target = $region36
        $region35: #{tpu_custom_call.1} parent=27 // pred_region
          %264 = dma.done %s256, 512
        $region36: #{tpu_custom_call.1} parent=27 // pred_fallthru
          _
        %s265 = sand.u32 %s62, 1
        %s266 = scalar_lea.sflag [#allocation3], %s265
        %s267 = sand.u32 %s62, 1
        %s268 = smul.addr %s267, 64
        %s269 = scalar_lea.vmem [#allocation2], %s268
        %p270 = pneg %p75
        %p271 = pneg %p72
        %s272 = sand.u32 %s96, 1
        %s273 = scalar_lea.sflag [#allocation6], %s272
        %s274 = sand.u32 %s96, 1
        %s275 = smul.addr %s274, 32
        %s276 = scalar_lea.vmem [#allocation5], %s275
        %p277 = pneg %p109
        %p278 = pneg %p106
        %p279 = pneg %p137
        %p280 = pneg %p134
        %s281 = sand.u32 %s124, 1
        %s282 = scalar_lea.sflag [#allocation4], %s281
        %s283 = sand.u32 %s124, 1
        %s284 = smul.addr %s283, 8
        %s285 = scalar_lea.vmem [#allocation7], %s284
        %p286 = pneg %p165
        %p287 = pneg %p162
        %s288 = sand.u32 %s152, 1
        %s289 = scalar_lea.sflag [#allocation9], %s288
        %s290 = sand.u32 %s152, 1
        %s291 = smul.addr %s290, 8
        %s292 = scalar_lea.vmem [#allocation8], %s291
        %s293 = sadd.s32 %s33, %s34
        %p294 = scmp.lt.s32.totalorder %s293, 0
        %s295 = scalar_select %p294, %s293, 0
        %s296 = smul.u32 2, %s295
        %s297 = sadd.s32 %s33, %s34
        %p298 = scmp.lt.s32.totalorder %s297, 0
        %s299 = scalar_select %p298, %s297, 0
        %s300 = smul.u32 2, %s299
        %s301 = sadd.s32 %s32, %s33
        %s302 = sadd.s32 %s32, %s33
        %p303 = scmp.eq.s32.totalorder %s34, 0
        // Predicated region
        $region37: #{tpu_custom_call.1} parent=27 // pred_check
          %p304 = pneg %p303
        $region38: #{tpu_custom_call.1} parent=27 // pred_check_branch
          %306 = sbr.rel (%p304) target = $region40
        $region39: #{tpu_custom_call.1} parent=27 // pred_region
          %307 = vst [vmem:[%s285] sm:$0xff] 0.0
          %308 = vst [vmem:[%s292] sm:$0xff] 0.0
        $region40: #{tpu_custom_call.1} parent=27 // pred_fallthru
          _
        %v309 = vld [vmem:[%s249] sm:$0xff]
        %v310 = vld [vmem:[%s249 + $0x8] sm:$0xff]
        %v311 = vld [vmem:[%s249 + $0x10] sm:$0xff]
        %v312 = vld [vmem:[%s249 + $0x18] sm:$0xff]
        %v313 = vld [vmem:[%s249 + $0x20] sm:$0xff]
        %v314 = vld [vmem:[%s249 + $0x28] sm:$0xff]
        %v315 = vld [vmem:[%s249 + $0x30] sm:$0xff]
        %v316 = vld [vmem:[%s249 + $0x38] sm:$0xff]
        %v317 = vmax.f32 %v309, %v313
        %v318 = vmax.f32 %v311, %v315
        %v319 = vmax.f32 %v317, %v318
        %v320 = vmax.f32 %v310, %v314
        %v321 = vmax.f32 %v312, %v316
        %v322 = vmax.f32 %v320, %v321
        %v323 = vsub.f32 %v309, %v319
        %v324 = vsub.f32 %v310, %v322
        %v325 = vsub.f32 %v311, %v319
        %v326 = vsub.f32 %v312, %v322
        %v327 = vsub.f32 %v313, %v319
        %v328 = vsub.f32 %v314, %v322
        %v329 = vsub.f32 %v315, %v319
        %v330 = vsub.f32 %v316, %v322
        %v331 = vmul.f32 %v323, 1.442695
        %v332 = vpow.pop %v331
        %v333 = vmul.f32 %v324, 1.442695
        %v334 = vpow.pop %v333
        %v335 = vmul.f32 %v325, 1.442695
        %v336 = vpow.pop %v335
        %v337 = vmul.f32 %v326, 1.442695
        %v338 = vpow.pop %v337
        %v339 = vmul.f32 %v327, 1.442695
        %v340 = vpow.pop %v339
        %v341 = vmul.f32 %v328, 1.442695
        %v342 = vpow.pop %v341
        %v343 = vmul.f32 %v329, 1.442695
        %v344 = vpow.pop %v343
        %v345 = vmul.f32 %v330, 1.442695
        %v346 = vpow.pop %v345
        %v347 = vadd.f32 %v332, %v336
        %v348 = vadd.f32 %v347, %v340
        %v349 = vadd.f32 %v348, %v344
        %v350 = vadd.f32 %v334, %v338
        %v351 = vadd.f32 %v350, %v342
        %v352 = vadd.f32 %v351, %v346
        %v353 = vrcp.pop %v349
        %v354 = vrcp.pop %v352
        %v355 = vld [vmem:[%s259] sm:$0xf]
        %v356 = vld [vmem:[%s259 + $0x4] sm:$0xf]
        %v357 = vld [vmem:[%s259 + $0x8] sm:$0xf]
        %v358 = vld [vmem:[%s259 + $0xc] sm:$0xf]
        %v359 = vld [vmem:[%s259 + $0x10] sm:$0xf]
        %v360 = vld [vmem:[%s259 + $0x14] sm:$0xf]
        %v361 = vld [vmem:[%s259 + $0x18] sm:$0xf]
        %v362 = vld [vmem:[%s259 + $0x1c] sm:$0xf]
        %v363 = vunpack.c.l.bf16 %v355
        %v364 = vunpack.c.l.bf16 %v356
        %v365 = vunpack.c.l.bf16 %v357
        %v366 = vunpack.c.l.bf16 %v358
        %v367 = vunpack.c.l.bf16 %v359
        %v368 = vunpack.c.l.bf16 %v360
        %v369 = vunpack.c.l.bf16 %v361
        %v370 = vunpack.c.l.bf16 %v362
        %v371 = vmul.f32 %v332, %v363
        %v372 = vmul.f32 %v334, %v364
        %v373 = vmul.f32 %v336, %v365
        %v374 = vmul.f32 %v338, %v366
        %v375 = vmul.f32 %v340, %v367
        %v376 = vmul.f32 %v342, %v368
        %v377 = vmul.f32 %v344, %v369
        %v378 = vmul.f32 %v346, %v370
        %v379 = vadd.f32 %v371, %v373
        %v380 = vadd.f32 %v379, %v375
        %v381 = vadd.f32 %v380, %v377
        %v382 = vadd.f32 %v372, %v374
        %v383 = vadd.f32 %v382, %v376
        %v384 = vadd.f32 %v383, %v378
        %v385 = vmul.f32 %v381, %v353
        %v386 = vmul.f32 %v384, %v354
        %v387 = vadd.f32 %v363, %v365
        %v388 = vadd.f32 %v387, %v367
        %v389 = vadd.f32 %v388, %v369
        %v390 = vadd.f32 %v364, %v366
        %v391 = vadd.f32 %v390, %v368
        %v392 = vadd.f32 %v391, %v370
        %v393 = vadd.f32 %v385, %v386
        %v394 = vadd.f32 %v393, 0.0
        %v395 = vadd.f32 %v389, %v392
        %v396 = vadd.f32 %v395, 0.0
        %v397 = vld [vmem:[%s285] sm:$0xff]
        %v398 = vadd.f32 %v397, %v394
        %399 = vst [vmem:[%s285] sm:$0xff] %v398
        %v400 = vld [vmem:[%s292] sm:$0xff]
        %v401 = vadd.f32 %v400, %v396
        %402 = vst [vmem:[%s292] sm:$0xff] %v401
        %s403 = sand.u32 %s124, 1
        %s404 = scalar_lea.sflag [#allocation4], %s403
        %s405 = sand.u32 %s124, 1
        %s406 = smul.addr %s405, 8
        %s407 = scalar_lea.vmem [#allocation7], %s406
        %s408 = sand.u32 %s152, 1
        %s409 = scalar_lea.sflag [#allocation9], %s408
        %s410 = sand.u32 %s152, 1
        %s411 = smul.addr %s410, 8
        %s412 = scalar_lea.vmem [#allocation8], %s411
        // Predicated region
        $region41: #{tpu_custom_call.1} parent=27 // pred_check
          %p413 = pneg %p134
        $region42: #{tpu_custom_call.1} parent=27 // pred_check_branch
          %415 = sbr.rel (%p413) target = $region44
        $region43: #{tpu_custom_call.1} parent=27 // pred_region
          %s416 = sadd.s32 %s32, %s33
          %418 = vsyncadd %s404, 0
          %s419 = smul.addr %s416, 8
          %s420 = scalar_lea.hbm %s2, %s419
          %s422 = sshll.u32 %s407, 4
          %s423 = int_to_ptr.vmem [resolvable:$true] %s422
          %s424 = sshll.u32 %s420, 4
          %s425 = int_to_ptr.hbm [resolvable:$true] %s424
          %427 = dma.vmem_to_hbm [thread:$0]  %s423, 128, %s425, %s404
        $region44: #{tpu_custom_call.1} parent=27 // pred_fallthru
          _
        // Predicated region
        $region45: #{tpu_custom_call.1} parent=27 // pred_check
          %p428 = pneg %p162
        $region46: #{tpu_custom_call.1} parent=27 // pred_check_branch
          %430 = sbr.rel (%p428) target = $region48
        $region47: #{tpu_custom_call.1} parent=27 // pred_region
          %s431 = sadd.s32 %s32, %s33
          %433 = vsyncadd %s409, 0
          %s434 = smul.addr %s431, 8
          %s435 = scalar_lea.hbm %s3, %s434
          %s437 = sshll.u32 %s412, 4
          %s438 = int_to_ptr.vmem [resolvable:$true] %s437
          %s439 = sshll.u32 %s435, 4
          %s440 = int_to_ptr.hbm [resolvable:$true] %s439
          %442 = dma.vmem_to_hbm [thread:$0]  %s438, 128, %s440, %s409
        $region48: #{tpu_custom_call.1} parent=27 // pred_fallthru
          _
      $region28: #{tpu_custom_call.1} parent=5 // pred_fallthru
        _
      %p443 = scmp.le.s32.totalorder 2, %s22
      // Predicated region
      $region49: #{tpu_custom_call.1} parent=5 // pred_check
        %p444 = pneg %p443
      $region50: #{tpu_custom_call.1} parent=5 // pred_check_branch
        %446 = sbr.rel (%p444) target = $region52
      $region51: #{tpu_custom_call.1} parent=5 // pred_region
        %s447 = ssub.s32 %s22, 2
        // Predicated region
        $region53: #{tpu_custom_call.1} parent=51 // pred_check
          %p448 = pneg %p140
        $region54: #{tpu_custom_call.1} parent=51 // pred_check_branch
          %450 = sbr.rel (%p448) target = $region56
        $region55: #{tpu_custom_call.1} parent=51 // pred_region
          %s451 = sand.u32 %s125, 1
          %s452 = scalar_lea.sflag [#allocation4], %s451
          %s453 = sand.u32 %s125, 1
          %s454 = smul.addr %s453, 8
          %s455 = scalar_lea.vmem [#allocation7], %s454
          %457 = dma.done %s452, 128
        $region56: #{tpu_custom_call.1} parent=51 // pred_fallthru
          _
        // Predicated region
        $region57: #{tpu_custom_call.1} parent=51 // pred_check
          %p458 = pneg %p168
        $region58: #{tpu_custom_call.1} parent=51 // pred_check_branch
          %460 = sbr.rel (%p458) target = $region60
        $region59: #{tpu_custom_call.1} parent=51 // pred_region
          %s461 = sand.u32 %s153, 1
          %s462 = scalar_lea.sflag [#allocation9], %s461
          %s463 = sand.u32 %s153, 1
          %s464 = smul.addr %s463, 8
          %s465 = scalar_lea.vmem [#allocation8], %s464
          %467 = dma.done %s462, 128
        $region60: #{tpu_custom_call.1} parent=51 // pred_fallthru
          _
      $region52: #{tpu_custom_call.1} parent=5 // pred_fallthru
        _
    $region6: #{tpu_custom_call.1} parent=1 // loop_footer
      %s26 = sadd.s32 1, %s22
    $region7: #{tpu_custom_call.1} parent=1 // loop_footer_branch
      %21 = sbr.rel target = $region3
    $region8: #{tpu_custom_call.1} parent=1 // loop_exit
      _
    %468 = vsyncpa [#allocation3], 1
    %s469 = scalar_lea.sflag [#allocation3], 1
    %470 = vsyncpa %s469, 1
    %471 = vsyncpa [#allocation6], 1
    %s472 = scalar_lea.sflag [#allocation6], 1
    %473 = vsyncpa %s472, 1
    %474 = vsyncpa [#allocation4], 1
    %s475 = scalar_lea.sflag [#allocation4], 1
    %476 = vsyncpa %s475, 1
    %477 = vsyncpa [#allocation9], 1
    %s478 = scalar_lea.sflag [#allocation9], 1
    %479 = vsyncpa %s478, 1

</llo_original>
